<compile_context>
chip_gen: v7x
topology: tpu7x:2x2x1
jax: 0.10.0
libtpu: 0.0.40
codegen_flags: <defaults>
</compile_context>

<pallas_src>
import jax
import jax.numpy as jnp
from jax.experimental import pallas as pl
from jax.experimental.pallas import tpu as pltpu

MAX_DEPTH = 3
LN_EPS = 1e-5
_INV_SQRT2 = 0.7071067811865475


def _bre_kernel(x_ref, w1_0_ref, w1r_ref, w2_ref, vecs_ref,
                states_ref, unified_ref):
    """One batch tile: fully depth-unrolled recursive encoder.

    states_ref block:  [bm, MAX_DEPTH*H]  (enc_d packed at lane offset d*H ->
                                           one lane-dense store, no transpose)
    unified_ref block: [bm, H]
    vecs_ref:          [MAX_DEPTH, 4, H]  rows = (b1_eff, ln_gamma, ln_beta, b2)
    """
    cur = x_ref[...].astype(jnp.float32)
    encs = []
    for d in range(MAX_DEPTH):
        v = vecs_ref[d]                                   # (4, H)
        b1, gamma, beta, b2 = v[0:1], v[1:2], v[2:3], v[3:4]
        # Linear1 (for d >= 1 the shared projection Wp/bp is pre-folded in).
        w1 = w1_0_ref[...] if d == 0 else w1r_ref[d - 1]
        h = jnp.dot(cur, w1, preferred_element_type=jnp.float32) + b1
        # LayerNorm: two-pass variance (stable, matches reference numerics),
        # gamma folded into the rsqrt scale.
        mu = jnp.mean(h, axis=-1, keepdims=True)
        hc = h - mu
        var = jnp.mean(hc * hc, axis=-1, keepdims=True)
        h_ln = hc * (gamma * jax.lax.rsqrt(var + LN_EPS)) + beta
        # Exact erf GELU (PyTorch default).  Dropout(0.1) is identity in eval.
        h_act = 0.5 * h_ln * (1.0 + jax.lax.erf(h_ln * _INV_SQRT2))
        # Linear2 -> this depth's encoding; it is also the next depth's input
        # (Wp/bp were absorbed into W1_{d+1}/b1_{d+1} on the host).
        enc = jnp.dot(h_act, w2_ref[d], preferred_element_type=jnp.float32) + b2
        encs.append(enc)
        cur = enc
    states_ref[...] = jnp.concatenate(encs, axis=-1)      # one wide store
    unified_ref[...] = sum(encs) * (1.0 / MAX_DEPTH)


def _pick_bm(B):
    # grid=(1,) whenever the whole batch comfortably fits VMEM / the register
    # file; only tile for large B, and cap bm at 256 in this [bm, H] layout so
    # the unrolled depth chain's live [bm, H] intermediates stay in vregs.
    if B <= 256:
        return B
    for cand in (256, 128, 64, 32, 16, 8):
        if B % cand == 0:
            return cand
    return B  # odd batch size: single-step fallback


def bounded_recursive_encoder(x, params, *, bm=None):
    """Run the Pallas kernel. params is a dict of f32 arrays (see init_params)."""
    B, Din = x.shape
    H = params["wp"].shape[0]

    if bm is None:
        bm = _pick_bm(B)
    assert B % bm == 0

    # ---- host-side param consolidation / fusion (tiny, one-time) ----
    hi = jax.lax.Precision.HIGHEST
    wp, bp = params["wp"], params["bp"]

    w1_0 = params["w1_0"]                                                # [Din, H]
    # Fold the shared projection into the next depth's Linear1:
    #   current = enc @ Wp + bp ;  h = current @ W1_d + b1_d
    #          == enc @ (Wp @ W1_d) + (bp @ W1_d + b1_d)
    w1r = jnp.stack([jnp.dot(wp, params[f"w1_{d}"], precision=hi)
                     for d in range(1, MAX_DEPTH)])                      # [D-1, H, H]
    w2 = jnp.stack([params[f"w2_{d}"] for d in range(MAX_DEPTH)])        # [D, H, H]

    def b1_eff(d):
        if d == 0:
            return params["b1_0"]
        return jnp.dot(bp, params[f"w1_{d}"], precision=hi) + params[f"b1_{d}"]

    vecs = jnp.stack([
        jnp.concatenate([b1_eff(d), params[f"gamma_{d}"],
                         params[f"beta_{d}"], params[f"b2_{d}"]], axis=0)
        for d in range(MAX_DEPTH)])                                      # [D, 4, H]

    inputs = (x, w1_0, w1r, w2, vecs)
    in_specs = [pl.BlockSpec((bm, Din), lambda i: (i, 0))]
    in_specs += [pl.BlockSpec(a.shape, lambda i, _nd=a.ndim: (0,) * _nd)
                 for a in inputs[1:]]

    out_shape = (
        jax.ShapeDtypeStruct((B, MAX_DEPTH * H), jnp.float32),  # packed states
        jax.ShapeDtypeStruct((B, H), jnp.float32),              # unified_state
    )
    out_specs = (
        pl.BlockSpec((bm, MAX_DEPTH * H), lambda i: (i, 0)),
        pl.BlockSpec((bm, H), lambda i: (i, 0)),
    )

    num_blocks = B // bm
    states_packed, unified = pl.pallas_call(
        _bre_kernel,
        out_shape=out_shape,
        grid_spec=pltpu.PrefetchScalarGridSpec(
            num_scalar_prefetch=0,
            grid=(num_blocks,),
            in_specs=in_specs,
            out_specs=out_specs,
        ),
        compiler_params=pltpu.CompilerParams(
            dimension_semantics=(
                ("parallel",) if num_blocks >= 4 else ("arbitrary",))),
    )(*inputs)

    # Row-major reshape [B, D*H] -> [B, D, H] is layout-free (no HBM pass).
    states = states_packed.reshape(B, MAX_DEPTH, H)
    return {"unified_state": unified, "recursive_states": states, "depth": MAX_DEPTH}


def init_params(key, input_dim, hidden_dim):
    """Deterministic synthetic parameters (shapes match the PyTorch module)."""
    params = {}
    keys = jax.random.split(key, 4 * MAX_DEPTH + 2)
    k = 0
    for d in range(MAX_DEPTH):
        in_d = input_dim if d == 0 else hidden_dim
        params[f"w1_{d}"] = (jax.random.normal(keys[k], (in_d, hidden_dim), jnp.float32)
                             * (1.0 / jnp.sqrt(in_d))); k += 1
        params[f"b1_{d}"] = (jax.random.normal(keys[k], (1, hidden_dim), jnp.float32)
                             * 0.02); k += 1
        params[f"gamma_{d}"] = jnp.ones((1, hidden_dim), jnp.float32)
        params[f"beta_{d}"] = jnp.zeros((1, hidden_dim), jnp.float32)
        params[f"w2_{d}"] = (jax.random.normal(keys[k], (hidden_dim, hidden_dim), jnp.float32)
                             * (1.0 / jnp.sqrt(hidden_dim))); k += 1
        params[f"b2_{d}"] = (jax.random.normal(keys[k], (1, hidden_dim), jnp.float32)
                             * 0.02); k += 1
    params["wp"] = (jax.random.normal(keys[k], (hidden_dim, hidden_dim), jnp.float32)
                    * (1.0 / jnp.sqrt(hidden_dim))); k += 1
    params["bp"] = (jax.random.normal(keys[k], (1, hidden_dim), jnp.float32) * 0.02)
    return params


def reference_forward(x, params):
    """Pure-JAX reference (mirrors the PyTorch module, unfused)."""
    cur = x.astype(jnp.float32)
    states = []
    for d in range(MAX_DEPTH):
        h = cur @ params[f"w1_{d}"] + params[f"b1_{d}"]
        mu = jnp.mean(h, axis=-1, keepdims=True)
        var = jnp.mean((h - mu) ** 2, axis=-1, keepdims=True)
        h = (h - mu) / jnp.sqrt(var + LN_EPS)
        h = h * params[f"gamma_{d}"] + params[f"beta_{d}"]
        h = 0.5 * h * (1.0 + jax.lax.erf(h / jnp.sqrt(2.0)))
        enc = h @ params[f"w2_{d}"] + params[f"b2_{d}"]
        states.append(enc)
        if d < MAX_DEPTH - 1:
            cur = enc @ params["wp"] + params["bp"]
    states = jnp.stack(states, axis=1)
    return states, jnp.mean(states, axis=1)


if __name__ == "__main__":
    B, INPUT_DIM, HIDDEN_DIM = 16, 16, 32   # bm = B -> grid=(1,), no per-step overhead

    key = jax.random.PRNGKey(0)
    k_params, k_x = jax.random.split(key)
    params = init_params(k_params, INPUT_DIM, HIDDEN_DIM)
    x = jax.random.normal(k_x, (B, INPUT_DIM), jnp.float32)

    out = bounded_recursive_encoder(x, params)
    jax.block_until_ready(out["unified_state"])
    jax.block_until_ready(out["recursive_states"])

    ref_states, ref_unified = reference_forward(x, params)

    assert out["recursive_states"].shape == (B, MAX_DEPTH, HIDDEN_DIM)
    assert out["unified_state"].shape == (B, HIDDEN_DIM)
    assert out["depth"] == MAX_DEPTH
    # Tolerance note: the kernel folds the shared projection Wp/bp into the next
    # depth's W1/b1 (pre-multiplied on the host at HIGHEST precision).  In exact
    # f32 this agrees with the reference to ~1e-6, but the in-kernel dots run at
    # DEFAULT TPU matmul precision (f32 via bf16 MXU passes) and the
    # reassociation means those roundings no longer cancel between kernel and
    # reference; 1e-2 comfortably covers that while still catching any real bug
    # (wrong layer / slice / norm), which would be O(1).
    assert jnp.allclose(out["recursive_states"], ref_states, rtol=1e-2, atol=1e-2)
    assert jnp.allclose(out["unified_state"], ref_unified, rtol=1e-2, atol=1e-2)

    print("KERNEL_OK")
</pallas_src>

<mosaic_0001>
module attributes {stable_mosaic.version = 11 : i64} {
  func.func @_bre_kernel(%arg0: i32, %arg1: memref<16x16xf32, #tpu.memory_space<vmem>>, %arg2: memref<16x32xf32, #tpu.memory_space<vmem>>, %arg3: memref<2x32x32xf32, #tpu.memory_space<vmem>>, %arg4: memref<3x32x32xf32, #tpu.memory_space<vmem>>, %arg5: memref<3x4x32xf32, #tpu.memory_space<vmem>>, %arg6: memref<16x96xf32, #tpu.memory_space<vmem>>, %arg7: memref<16x32xf32, #tpu.memory_space<vmem>>) attributes {dimension_semantics = [#tpu.dimension_semantics<arbitrary>], iteration_bounds = array<i64: 1>, scalar_prefetch = 0 : i64, scratch_operands = 0 : i64, tpu.core_type = #tpu.core_type<tc>, window_params = [{transform_indices = @transform_0, window_bounds = array<i64: 16, 16>}, {pipeline_mode = #tpu.pipeline_mode<synchronous>, transform_indices = @transform_1, window_bounds = array<i64: 16, 32>}, {pipeline_mode = #tpu.pipeline_mode<synchronous>, transform_indices = @transform_2, window_bounds = array<i64: 2, 32, 32>}, {pipeline_mode = #tpu.pipeline_mode<synchronous>, transform_indices = @transform_3, window_bounds = array<i64: 3, 32, 32>}, {pipeline_mode = #tpu.pipeline_mode<synchronous>, transform_indices = @transform_4, window_bounds = array<i64: 3, 4, 32>}, {transform_indices = @transform_5, window_bounds = array<i64: 16, 96>}, {transform_indices = @transform_6, window_bounds = array<i64: 16, 32>}]} {
    %c0 = arith.constant 0 : index
    %c0_0 = arith.constant 0 : index
    %0 = vector.load %arg1[%c0, %c0_0] : memref<16x16xf32, #tpu.memory_space<vmem>>, vector<16x16xf32>
    %c0_1 = arith.constant 0 : index
    %c0_2 = arith.constant 0 : index
    %c0_3 = arith.constant 0 : index
    %1 = vector.load %arg5[%c0_1, %c0_2, %c0_3] : memref<3x4x32xf32, #tpu.memory_space<vmem>>, vector<1x4x32xf32>
    %2 = vector.shape_cast %1 : vector<1x4x32xf32> to vector<4x32xf32>
    %3 = vector.extract_strided_slice %2 {offsets = [0, 0], sizes = [1, 32], strides = [1, 1]} : vector<4x32xf32> to vector<1x32xf32>
    %4 = vector.extract_strided_slice %2 {offsets = [1, 0], sizes = [1, 32], strides = [1, 1]} : vector<4x32xf32> to vector<1x32xf32>
    %5 = vector.extract_strided_slice %2 {offsets = [2, 0], sizes = [1, 32], strides = [1, 1]} : vector<4x32xf32> to vector<1x32xf32>
    %6 = vector.extract_strided_slice %2 {offsets = [3, 0], sizes = [1, 32], strides = [1, 1]} : vector<4x32xf32> to vector<1x32xf32>
    %c0_4 = arith.constant 0 : index
    %c0_5 = arith.constant 0 : index
    %7 = vector.load %arg2[%c0_4, %c0_5] : memref<16x32xf32, #tpu.memory_space<vmem>>, vector<16x32xf32>
    %cst = arith.constant dense<0.000000e+00> : vector<16x32xf32>
    %8 = tpu.matmul %0, %7, %cst {dimension_numbers = #tpu.dot_dimension_numbers<[1], [0], [0], [1], [0, 0, 1, 1], [], []>} : vector<16x16xf32>, vector<16x32xf32>, vector<16x32xf32> -> vector<16x32xf32>
    %9 = vector.broadcast %3 : vector<1x32xf32> to vector<16x32xf32>
    %10 = arith.addf %8, %9 : vector<16x32xf32>
    %cst_6 = arith.constant dense<0.000000e+00> : vector<16xf32>
    %11 = vector.multi_reduction <add>, %10, %cst_6 [1] : vector<16x32xf32> to vector<16xf32>
    %12 = vector.shape_cast %11 : vector<16xf32> to vector<16x1xf32>
    %cst_7 = arith.constant 3.200000e+01 : f32
    %13 = vector.broadcast %cst_7 : f32 to vector<16x1xf32>
    %14 = arith.divf %12, %13 : vector<16x1xf32>
    %15 = vector.broadcast %14 : vector<16x1xf32> to vector<16x32xf32>
    %16 = arith.subf %10, %15 : vector<16x32xf32>
    %17 = arith.mulf %16, %16 : vector<16x32xf32>
    %cst_8 = arith.constant dense<0.000000e+00> : vector<16xf32>
    %18 = vector.multi_reduction <add>, %17, %cst_8 [1] : vector<16x32xf32> to vector<16xf32>
    %19 = vector.shape_cast %18 : vector<16xf32> to vector<16x1xf32>
    %cst_9 = arith.constant 3.200000e+01 : f32
    %20 = vector.broadcast %cst_9 : f32 to vector<16x1xf32>
    %21 = arith.divf %19, %20 : vector<16x1xf32>
    %cst_10 = arith.constant 9.99999974E-6 : f32
    %22 = vector.broadcast %cst_10 : f32 to vector<16x1xf32>
    %23 = arith.addf %21, %22 : vector<16x1xf32>
    %24 = math.rsqrt %23 : vector<16x1xf32>
    %25 = vector.broadcast %4 : vector<1x32xf32> to vector<16x32xf32>
    %26 = vector.broadcast %24 : vector<16x1xf32> to vector<16x32xf32>
    %27 = arith.mulf %25, %26 : vector<16x32xf32>
    %28 = arith.mulf %16, %27 : vector<16x32xf32>
    %29 = vector.broadcast %5 : vector<1x32xf32> to vector<16x32xf32>
    %30 = arith.addf %28, %29 : vector<16x32xf32>
    %cst_11 = arith.constant 5.000000e-01 : f32
    %31 = vector.broadcast %cst_11 : f32 to vector<16x32xf32>
    %32 = arith.mulf %31, %30 : vector<16x32xf32>
    %cst_12 = arith.constant 0.707106769 : f32
    %33 = vector.broadcast %cst_12 : f32 to vector<16x32xf32>
    %34 = arith.mulf %30, %33 : vector<16x32xf32>
    %35 = math.erf %34 : vector<16x32xf32>
    %cst_13 = arith.constant 1.000000e+00 : f32
    %36 = vector.broadcast %cst_13 : f32 to vector<16x32xf32>
    %37 = arith.addf %36, %35 : vector<16x32xf32>
    %38 = arith.mulf %32, %37 : vector<16x32xf32>
    %c0_14 = arith.constant 0 : index
    %c0_15 = arith.constant 0 : index
    %c0_16 = arith.constant 0 : index
    %39 = vector.load %arg4[%c0_14, %c0_15, %c0_16] : memref<3x32x32xf32, #tpu.memory_space<vmem>>, vector<1x32x32xf32>
    %40 = vector.shape_cast %39 : vector<1x32x32xf32> to vector<32x32xf32>
    %cst_17 = arith.constant dense<0.000000e+00> : vector<16x32xf32>
    %41 = tpu.matmul %38, %40, %cst_17 {dimension_numbers = #tpu.dot_dimension_numbers<[1], [0], [0], [1], [0, 0, 1, 1], [], []>} : vector<16x32xf32>, vector<32x32xf32>, vector<16x32xf32> -> vector<16x32xf32>
    %42 = vector.broadcast %6 : vector<1x32xf32> to vector<16x32xf32>
    %43 = arith.addf %41, %42 : vector<16x32xf32>
    %c1 = arith.constant 1 : index
    %c0_18 = arith.constant 0 : index
    %c0_19 = arith.constant 0 : index
    %44 = vector.load %arg5[%c1, %c0_18, %c0_19] : memref<3x4x32xf32, #tpu.memory_space<vmem>>, vector<1x4x32xf32>
    %45 = vector.shape_cast %44 : vector<1x4x32xf32> to vector<4x32xf32>
    %46 = vector.extract_strided_slice %45 {offsets = [0, 0], sizes = [1, 32], strides = [1, 1]} : vector<4x32xf32> to vector<1x32xf32>
    %47 = vector.extract_strided_slice %45 {offsets = [1, 0], sizes = [1, 32], strides = [1, 1]} : vector<4x32xf32> to vector<1x32xf32>
    %48 = vector.extract_strided_slice %45 {offsets = [2, 0], sizes = [1, 32], strides = [1, 1]} : vector<4x32xf32> to vector<1x32xf32>
    %49 = vector.extract_strided_slice %45 {offsets = [3, 0], sizes = [1, 32], strides = [1, 1]} : vector<4x32xf32> to vector<1x32xf32>
    %c0_20 = arith.constant 0 : index
    %c0_21 = arith.constant 0 : index
    %c0_22 = arith.constant 0 : index
    %50 = vector.load %arg3[%c0_20, %c0_21, %c0_22] : memref<2x32x32xf32, #tpu.memory_space<vmem>>, vector<1x32x32xf32>
    %51 = vector.shape_cast %50 : vector<1x32x32xf32> to vector<32x32xf32>
    %cst_23 = arith.constant dense<0.000000e+00> : vector<16x32xf32>
    %52 = tpu.matmul %43, %51, %cst_23 {dimension_numbers = #tpu.dot_dimension_numbers<[1], [0], [0], [1], [0, 0, 1, 1], [], []>} : vector<16x32xf32>, vector<32x32xf32>, vector<16x32xf32> -> vector<16x32xf32>
    %53 = vector.broadcast %46 : vector<1x32xf32> to vector<16x32xf32>
    %54 = arith.addf %52, %53 : vector<16x32xf32>
    %cst_24 = arith.constant dense<0.000000e+00> : vector<16xf32>
    %55 = vector.multi_reduction <add>, %54, %cst_24 [1] : vector<16x32xf32> to vector<16xf32>
    %56 = vector.shape_cast %55 : vector<16xf32> to vector<16x1xf32>
    %cst_25 = arith.constant 3.200000e+01 : f32
    %57 = vector.broadcast %cst_25 : f32 to vector<16x1xf32>
    %58 = arith.divf %56, %57 : vector<16x1xf32>
    %59 = vector.broadcast %58 : vector<16x1xf32> to vector<16x32xf32>
    %60 = arith.subf %54, %59 : vector<16x32xf32>
    %61 = arith.mulf %60, %60 : vector<16x32xf32>
    %cst_26 = arith.constant dense<0.000000e+00> : vector<16xf32>
    %62 = vector.multi_reduction <add>, %61, %cst_26 [1] : vector<16x32xf32> to vector<16xf32>
    %63 = vector.shape_cast %62 : vector<16xf32> to vector<16x1xf32>
    %cst_27 = arith.constant 3.200000e+01 : f32
    %64 = vector.broadcast %cst_27 : f32 to vector<16x1xf32>
    %65 = arith.divf %63, %64 : vector<16x1xf32>
    %cst_28 = arith.constant 9.99999974E-6 : f32
    %66 = vector.broadcast %cst_28 : f32 to vector<16x1xf32>
    %67 = arith.addf %65, %66 : vector<16x1xf32>
    %68 = math.rsqrt %67 : vector<16x1xf32>
    %69 = vector.broadcast %47 : vector<1x32xf32> to vector<16x32xf32>
    %70 = vector.broadcast %68 : vector<16x1xf32> to vector<16x32xf32>
    %71 = arith.mulf %69, %70 : vector<16x32xf32>
    %72 = arith.mulf %60, %71 : vector<16x32xf32>
    %73 = vector.broadcast %48 : vector<1x32xf32> to vector<16x32xf32>
    %74 = arith.addf %72, %73 : vector<16x32xf32>
    %cst_29 = arith.constant 5.000000e-01 : f32
    %75 = vector.broadcast %cst_29 : f32 to vector<16x32xf32>
    %76 = arith.mulf %75, %74 : vector<16x32xf32>
    %cst_30 = arith.constant 0.707106769 : f32
    %77 = vector.broadcast %cst_30 : f32 to vector<16x32xf32>
    %78 = arith.mulf %74, %77 : vector<16x32xf32>
    %79 = math.erf %78 : vector<16x32xf32>
    %cst_31 = arith.constant 1.000000e+00 : f32
    %80 = vector.broadcast %cst_31 : f32 to vector<16x32xf32>
    %81 = arith.addf %80, %79 : vector<16x32xf32>
    %82 = arith.mulf %76, %81 : vector<16x32xf32>
    %c1_32 = arith.constant 1 : index
    %c0_33 = arith.constant 0 : index
    %c0_34 = arith.constant 0 : index
    %83 = vector.load %arg4[%c1_32, %c0_33, %c0_34] : memref<3x32x32xf32, #tpu.memory_space<vmem>>, vector<1x32x32xf32>
    %84 = vector.shape_cast %83 : vector<1x32x32xf32> to vector<32x32xf32>
    %cst_35 = arith.constant dense<0.000000e+00> : vector<16x32xf32>
    %85 = tpu.matmul %82, %84, %cst_35 {dimension_numbers = #tpu.dot_dimension_numbers<[1], [0], [0], [1], [0, 0, 1, 1], [], []>} : vector<16x32xf32>, vector<32x32xf32>, vector<16x32xf32> -> vector<16x32xf32>
    %86 = vector.broadcast %49 : vector<1x32xf32> to vector<16x32xf32>
    %87 = arith.addf %85, %86 : vector<16x32xf32>
    %c2 = arith.constant 2 : index
    %c0_36 = arith.constant 0 : index
    %c0_37 = arith.constant 0 : index
    %88 = vector.load %arg5[%c2, %c0_36, %c0_37] : memref<3x4x32xf32, #tpu.memory_space<vmem>>, vector<1x4x32xf32>
    %89 = vector.shape_cast %88 : vector<1x4x32xf32> to vector<4x32xf32>
    %90 = vector.extract_strided_slice %89 {offsets = [0, 0], sizes = [1, 32], strides = [1, 1]} : vector<4x32xf32> to vector<1x32xf32>
    %91 = vector.extract_strided_slice %89 {offsets = [1, 0], sizes = [1, 32], strides = [1, 1]} : vector<4x32xf32> to vector<1x32xf32>
    %92 = vector.extract_strided_slice %89 {offsets = [2, 0], sizes = [1, 32], strides = [1, 1]} : vector<4x32xf32> to vector<1x32xf32>
    %93 = vector.extract_strided_slice %89 {offsets = [3, 0], sizes = [1, 32], strides = [1, 1]} : vector<4x32xf32> to vector<1x32xf32>
    %c1_38 = arith.constant 1 : index
    %c0_39 = arith.constant 0 : index
    %c0_40 = arith.constant 0 : index
    %94 = vector.load %arg3[%c1_38, %c0_39, %c0_40] : memref<2x32x32xf32, #tpu.memory_space<vmem>>, vector<1x32x32xf32>
    %95 = vector.shape_cast %94 : vector<1x32x32xf32> to vector<32x32xf32>
    %cst_41 = arith.constant dense<0.000000e+00> : vector<16x32xf32>
    %96 = tpu.matmul %87, %95, %cst_41 {dimension_numbers = #tpu.dot_dimension_numbers<[1], [0], [0], [1], [0, 0, 1, 1], [], []>} : vector<16x32xf32>, vector<32x32xf32>, vector<16x32xf32> -> vector<16x32xf32>
    %97 = vector.broadcast %90 : vector<1x32xf32> to vector<16x32xf32>
    %98 = arith.addf %96, %97 : vector<16x32xf32>
    %cst_42 = arith.constant dense<0.000000e+00> : vector<16xf32>
    %99 = vector.multi_reduction <add>, %98, %cst_42 [1] : vector<16x32xf32> to vector<16xf32>
    %100 = vector.shape_cast %99 : vector<16xf32> to vector<16x1xf32>
    %cst_43 = arith.constant 3.200000e+01 : f32
    %101 = vector.broadcast %cst_43 : f32 to vector<16x1xf32>
    %102 = arith.divf %100, %101 : vector<16x1xf32>
    %103 = vector.broadcast %102 : vector<16x1xf32> to vector<16x32xf32>
    %104 = arith.subf %98, %103 : vector<16x32xf32>
    %105 = arith.mulf %104, %104 : vector<16x32xf32>
    %cst_44 = arith.constant dense<0.000000e+00> : vector<16xf32>
    %106 = vector.multi_reduction <add>, %105, %cst_44 [1] : vector<16x32xf32> to vector<16xf32>
    %107 = vector.shape_cast %106 : vector<16xf32> to vector<16x1xf32>
    %cst_45 = arith.constant 3.200000e+01 : f32
    %108 = vector.broadcast %cst_45 : f32 to vector<16x1xf32>
    %109 = arith.divf %107, %108 : vector<16x1xf32>
    %cst_46 = arith.constant 9.99999974E-6 : f32
    %110 = vector.broadcast %cst_46 : f32 to vector<16x1xf32>
    %111 = arith.addf %109, %110 : vector<16x1xf32>
    %112 = math.rsqrt %111 : vector<16x1xf32>
    %113 = vector.broadcast %91 : vector<1x32xf32> to vector<16x32xf32>
    %114 = vector.broadcast %112 : vector<16x1xf32> to vector<16x32xf32>
    %115 = arith.mulf %113, %114 : vector<16x32xf32>
    %116 = arith.mulf %104, %115 : vector<16x32xf32>
    %117 = vector.broadcast %92 : vector<1x32xf32> to vector<16x32xf32>
    %118 = arith.addf %116, %117 : vector<16x32xf32>
    %cst_47 = arith.constant 5.000000e-01 : f32
    %119 = vector.broadcast %cst_47 : f32 to vector<16x32xf32>
    %120 = arith.mulf %119, %118 : vector<16x32xf32>
    %cst_48 = arith.constant 0.707106769 : f32
    %121 = vector.broadcast %cst_48 : f32 to vector<16x32xf32>
    %122 = arith.mulf %118, %121 : vector<16x32xf32>
    %123 = math.erf %122 : vector<16x32xf32>
    %cst_49 = arith.constant 1.000000e+00 : f32
    %124 = vector.broadcast %cst_49 : f32 to vector<16x32xf32>
    %125 = arith.addf %124, %123 : vector<16x32xf32>
    %126 = arith.mulf %120, %125 : vector<16x32xf32>
    %c2_50 = arith.constant 2 : index
    %c0_51 = arith.constant 0 : index
    %c0_52 = arith.constant 0 : index
    %127 = vector.load %arg4[%c2_50, %c0_51, %c0_52] : memref<3x32x32xf32, #tpu.memory_space<vmem>>, vector<1x32x32xf32>
    %128 = vector.shape_cast %127 : vector<1x32x32xf32> to vector<32x32xf32>
    %cst_53 = arith.constant dense<0.000000e+00> : vector<16x32xf32>
    %129 = tpu.matmul %126, %128, %cst_53 {dimension_numbers = #tpu.dot_dimension_numbers<[1], [0], [0], [1], [0, 0, 1, 1], [], []>} : vector<16x32xf32>, vector<32x32xf32>, vector<16x32xf32> -> vector<16x32xf32>
    %130 = vector.broadcast %93 : vector<1x32xf32> to vector<16x32xf32>
    %131 = arith.addf %129, %130 : vector<16x32xf32>
    %132 = tpu.concatenate %43, %87, %131 in 1 : vector<16x32xf32>, vector<16x32xf32>, vector<16x32xf32> -> vector<16x96xf32>
    %c0_54 = arith.constant 0 : index
    %c0_55 = arith.constant 0 : index
    %133 = vector.load %arg6[%c0_54, %c0_55] : memref<16x96xf32, #tpu.memory_space<vmem>>, vector<16x96xf32>
    tpu.vector_store %arg6[%c0_54, %c0_55], %132 {strides = array<i32>} : memref<16x96xf32, #tpu.memory_space<vmem>>, vector<16x96xf32>,
    %cst_56 = arith.constant 0.000000e+00 : f32
    %134 = vector.broadcast %cst_56 : f32 to vector<16x32xf32>
    %135 = arith.addf %134, %43 : vector<16x32xf32>
    %136 = arith.addf %135, %87 : vector<16x32xf32>
    %137 = arith.addf %136, %131 : vector<16x32xf32>
    %cst_57 = arith.constant 0.333333343 : f32
    %138 = vector.broadcast %cst_57 : f32 to vector<16x32xf32>
    %139 = arith.mulf %137, %138 : vector<16x32xf32>
    %c0_58 = arith.constant 0 : index
    %c0_59 = arith.constant 0 : index
    %140 = vector.load %arg7[%c0_58, %c0_59] : memref<16x32xf32, #tpu.memory_space<vmem>>, vector<16x32xf32>
    tpu.vector_store %arg7[%c0_58, %c0_59], %139 {strides = array<i32>} : memref<16x32xf32, #tpu.memory_space<vmem>>, vector<16x32xf32>,
    return
  }
  func.func @transform_0(%arg0: i32) -> (i32, i32) {
    %c0_i32 = arith.constant 0 : i32
    %c0_i32_0 = arith.constant 0 : i32
    return %arg0, %c0_i32 : i32, i32
  }
  func.func @transform_1(%arg0: i32) -> (i32, i32) {
    %c0_i32 = arith.constant 0 : i32
    %c0_i32_0 = arith.constant 0 : i32
    %c0_i32_1 = arith.constant 0 : i32
    return %c0_i32, %c0_i32_0 : i32, i32
  }
  func.func @transform_2(%arg0: i32) -> (i32, i32, i32) {
    %c0_i32 = arith.constant 0 : i32
    %c0_i32_0 = arith.constant 0 : i32
    %c0_i32_1 = arith.constant 0 : i32
    %c0_i32_2 = arith.constant 0 : i32
    return %c0_i32, %c0_i32_0, %c0_i32_1 : i32, i32, i32
  }
  func.func @transform_3(%arg0: i32) -> (i32, i32, i32) {
    %c0_i32 = arith.constant 0 : i32
    %c0_i32_0 = arith.constant 0 : i32
    %c0_i32_1 = arith.constant 0 : i32
    %c0_i32_2 = arith.constant 0 : i32
    return %c0_i32, %c0_i32_0, %c0_i32_1 : i32, i32, i32
  }
  func.func @transform_4(%arg0: i32) -> (i32, i32, i32) {
    %c0_i32 = arith.constant 0 : i32
    %c0_i32_0 = arith.constant 0 : i32
    %c0_i32_1 = arith.constant 0 : i32
    %c0_i32_2 = arith.constant 0 : i32
    return %c0_i32, %c0_i32_0, %c0_i32_1 : i32, i32, i32
  }
  func.func @transform_5(%arg0: i32) -> (i32, i32) {
    %c0_i32 = arith.constant 0 : i32
    %c0_i32_0 = arith.constant 0 : i32
    return %arg0, %c0_i32 : i32, i32
  }
  func.func @transform_6(%arg0: i32) -> (i32, i32) {
    %c0_i32 = arith.constant 0 : i32
    %c0_i32_0 = arith.constant 0 : i32
    return %arg0, %c0_i32 : i32, i32
  }
}

</mosaic_0001>

<llo_original>
// kernel: tpu_custom_call.1
$region0: #{tpu_custom_call.1}
  #allocation0 [shape = 'u32[]', space=smem, size = 0x4, offset = 0x4, fixed_abs, tag = 'smem constant byte address 0x4 - core index']
  #allocation1 [shape = 'u32[144,128]{1,0:T(1,128)}', space=vmem, size = 0x12000, scoped, tag = 'internal scratch']
  %s0 = inlined_call_operand.hbm [shape: f32[16,16], index: 0, kind: input, shape index: {}]
  %s1 = inlined_call_operand.hbm [shape: f32[16,32], index: 1, kind: input, shape index: {}]
  %s2 = inlined_call_operand.hbm [shape: f32[2,32,32], index: 2, kind: input, shape index: {}]
  %s3 = inlined_call_operand.hbm [shape: f32[3,32,32], index: 3, kind: input, shape index: {}]
  %s4 = inlined_call_operand.vmem [shape: f32[3,4,32], index: 4, kind: input, shape index: {}]
  %s5 = inlined_call_operand.hbm [shape: f32[16,96], index: 5, kind: output, shape index: {0}]
  %s6 = inlined_call_operand.hbm [shape: f32[16,32], index: 6, kind: output, shape index: {1}]
  %7 = xla_tuple %s5, %s6
  %s8 = sld [smem:[#allocation0]]
  $region54: #{tpu_custom_call.1} parent=0
    _
  %s10 = ssub.s32 1, %s8
  %s11 = scalar_select 0, %s10, %s8
  $region1: #{tpu_custom_call.1} parent=0
    #allocation2 [shape = 'u8[8192]{0}', space=vmem, size = 0x2000, scoped, tag = 'input window, operand 0, single buffered']
    #allocation3 [shape = 's32[1]{0}', space=sflag, size = 0x4, scoped, tag = 'scoped memory for tpu_custom_call.1']
    #allocation4 [shape = 's32[1]{0}', space=sflag, size = 0x4, scoped, tag = 'scoped memory for tpu_custom_call.1']
    #allocation5 [shape = 'u8[8192]{0}', space=vmem, size = 0x2000, scoped, tag = 'input window, operand 1, single buffered']
    #allocation6 [shape = 's32[1]{0}', space=sflag, size = 0x4, scoped, tag = 'scoped memory for tpu_custom_call.1']
    #allocation7 [shape = 'u8[32768]{0}', space=vmem, size = 0x8000, scoped, tag = 'input window, operand 2, single buffered']
    #allocation8 [shape = 'u8[49152]{0}', space=vmem, size = 0xc000, scoped, tag = 'input window, operand 3, single buffered']
    #allocation9 [shape = 's32[1]{0}', space=sflag, size = 0x4, scoped, tag = 'scoped memory for tpu_custom_call.1']
    #allocation10 [shape = 'u8[8192]{0}', space=vmem, size = 0x2000, scoped, tag = 'output window, operand 0, single buffered']
    #allocation11 [shape = 'u8[8192]{0}', space=vmem, size = 0x2000, scoped, tag = 'output window, operand 1, single buffered']
    #allocation12 [shape = 's32[1]{0}', space=sflag, size = 0x4, scoped, tag = 'scoped memory for tpu_custom_call.1']
    %12 = vsyncpa [#allocation3], 0
    %13 = vsyncpa [#allocation6], 0
    %14 = vsyncpa [#allocation9], 0
    %15 = vsyncpa [#allocation4], 0
    %16 = vsyncpa [#allocation12], 0
    // Predicated region
    $region2: #{tpu_custom_call.1} parent=1 // pred_check
      _
    $region3: #{tpu_custom_call.1} parent=1 // pred_check_branch
      %18 = sbr.rel (0) target = $region5
    $region4: #{tpu_custom_call.1} parent=1 // pred_region
      %s20 = ssub.s32 256, 256
      %21 = vsyncadd [#allocation3], %s20
      %s22 = sshll.u32 [#allocation2], 4
      %s23 = int_to_ptr.vmem [resolvable:$true] %s22
      %28 = dma.hbm_to_vmem [thread:$0]  %s0, 256, %s23, [#allocation3], 128, 128, 8
    $region5: #{tpu_custom_call.1} parent=1 // pred_fallthru
      _
    // Predicated region
    $region6: #{tpu_custom_call.1} parent=1 // pred_check
      _
    $region7: #{tpu_custom_call.1} parent=1 // pred_check_branch
      %30 = sbr.rel (0) target = $region9
    $region8: #{tpu_custom_call.1} parent=1 // pred_region
      %s32 = ssub.s32 256, 256
      %33 = vsyncadd [#allocation6], %s32
      %s34 = sshll.u32 [#allocation5], 4
      %s35 = int_to_ptr.vmem [resolvable:$true] %s34
      %40 = dma.hbm_to_vmem [thread:$0]  %s1, 256, %s35, [#allocation6], 128, 128, 8
    $region9: #{tpu_custom_call.1} parent=1 // pred_fallthru
      _
    // Predicated region
    $region10: #{tpu_custom_call.1} parent=1 // pred_check
      _
    $region11: #{tpu_custom_call.1} parent=1 // pred_check_branch
      %42 = sbr.rel (0) target = $region13
    $region12: #{tpu_custom_call.1} parent=1 // pred_region
      %s44 = ssub.s32 1024, 1024
      %45 = vsyncadd [#allocation6], %s44
      %s46 = sshll.u32 [#allocation7], 4
      %s47 = int_to_ptr.vmem [resolvable:$true] %s46
      %52 = dma.hbm_to_vmem [thread:$0]  %s2, 1024, %s47, [#allocation6], 128, 128, 8
    $region13: #{tpu_custom_call.1} parent=1 // pred_fallthru
      _
    // Predicated region
    $region14: #{tpu_custom_call.1} parent=1 // pred_check
      _
    $region15: #{tpu_custom_call.1} parent=1 // pred_check_branch
      %54 = sbr.rel (0) target = $region17
    $region16: #{tpu_custom_call.1} parent=1 // pred_region
      %s56 = ssub.s32 1536, 1536
      %57 = vsyncadd [#allocation9], %s56
      %s58 = sshll.u32 [#allocation8], 4
      %s59 = int_to_ptr.vmem [resolvable:$true] %s58
      %64 = dma.hbm_to_vmem [thread:$0]  %s3, 1536, %s59, [#allocation9], 128, 128, 8
    $region17: #{tpu_custom_call.1} parent=1 // pred_fallthru
      _
    // Predicated region
    $region18: #{tpu_custom_call.1} parent=1 // pred_check
      _
    $region19: #{tpu_custom_call.1} parent=1 // pred_check_branch
      %66 = sbr.rel (0) target = $region21
    $region20: #{tpu_custom_call.1} parent=1 // pred_region
      _
    $region21: #{tpu_custom_call.1} parent=1 // pred_fallthru
      _
    // Predicated region
    $region22: #{tpu_custom_call.1} parent=1 // pred_check
      _
    $region23: #{tpu_custom_call.1} parent=1 // pred_check_branch
      %68 = sbr.rel (0) target = $region25
    $region24: #{tpu_custom_call.1} parent=1 // pred_region
      %69 = dma.done [#allocation3], 256
    $region25: #{tpu_custom_call.1} parent=1 // pred_fallthru
      _
    // Predicated region
    $region26: #{tpu_custom_call.1} parent=1 // pred_check
      _
    $region27: #{tpu_custom_call.1} parent=1 // pred_check_branch
      %71 = sbr.rel (0) target = $region29
    $region28: #{tpu_custom_call.1} parent=1 // pred_region
      %72 = dma.done [#allocation6], 256
    $region29: #{tpu_custom_call.1} parent=1 // pred_fallthru
      _
    // Predicated region
    $region30: #{tpu_custom_call.1} parent=1 // pred_check
      _
    $region31: #{tpu_custom_call.1} parent=1 // pred_check_branch
      %74 = sbr.rel (0) target = $region33
    $region32: #{tpu_custom_call.1} parent=1 // pred_region
      %75 = dma.done [#allocation6], 1024
    $region33: #{tpu_custom_call.1} parent=1 // pred_fallthru
      _
    // Predicated region
    $region34: #{tpu_custom_call.1} parent=1 // pred_check
      _
    $region35: #{tpu_custom_call.1} parent=1 // pred_check_branch
      %77 = sbr.rel (0) target = $region37
    $region36: #{tpu_custom_call.1} parent=1 // pred_region
      %78 = dma.done [#allocation9], 1536
    $region37: #{tpu_custom_call.1} parent=1 // pred_fallthru
      _
    %v79 = vld [vmem:[#allocation2] sm:$0xff]
    %v80 = vld [vmem:[#allocation2 + $0x8] sm:$0xff]
    %v81 = vld [vmem:[%s4] sm:$0xf]
    %v82 = vld [vmem:[#allocation5] sm:$0xff]
    %v83 = vld [vmem:[#allocation5 + $0x8] sm:$0xff]
    %v84 = vlaneseq
    %v85 = vshrl.u32 %v84, 7
    %v86 = vsub.s32 0, %v85
    %v87 = vrot.slane %v81, %v86
    %vm88 = vcmask 130048
    %v90 = vsel %vm88, %v79, 0
    %v93 = vsel %vm88, %v80, 0
    %95 = vmatprep.subr.mxu0 0.0
    %96 = vmatpush1.msra.mxu0 %v82
    %97 = vmatprep.subr.mxu0 0.0
    %98 = vmatpush1.msra.mxu0 %v83
    %99 = vmatprep.subr.mxu0 0.0
    %100 = vmatpush1.msra.mxu0 0.0
    %101 = vmatprep.subr.mxu0 0.0
    %102 = vmatpush1.msra.mxu0 0.0
    %103 = vmatprep.subr.mxu0 0.0
    %104 = vmatpush1.msra.mxu0 0.0
    %105 = vmatprep.subr.mxu0 0.0
    %106 = vmatpush1.msra.mxu0 0.0
    %107 = vmatprep.subr.mxu0 0.0
    %108 = vmatpush1.msra.mxu0 0.0
    %109 = vmatprep.subr.mxu0 0.0
    %110 = vmatpush1.msra.mxu0 0.0
    %111 = vmatprep.subr.mxu0 0.0
    %112 = vmatpush1.msra.mxu0 0.0
    %113 = vmatprep.subr.mxu0 0.0
    %114 = vmatpush1.msra.mxu0 0.0
    %115 = vmatprep.subr.mxu0 0.0
    %116 = vmatpush1.msra.mxu0 0.0
    %117 = vmatprep.subr.mxu0 0.0
    %118 = vmatpush1.msra.mxu0 0.0
    %119 = vmatprep.subr.mxu0 0.0
    %120 = vmatpush1.msra.mxu0 0.0
    %121 = vmatprep.subr.mxu0 0.0
    %122 = vmatpush1.msra.mxu0 0.0
    %123 = vmatprep.subr.mxu0 0.0
    %124 = vmatpush1.msra.mxu0 0.0
    %125 = vmatprep.subr.mxu0 0.0
    %126 = vmatpush1.msra.mxu0 0.0
    %127 = vmatprep.subr.mxu0 0.0
    %128 = vmatpush1.msra.mxu0 0.0
    %129 = vmatprep.subr.mxu0 0.0
    %130 = vmatpush1.msra.mxu0 0.0
    %131 = vmatprep.subr.mxu0 0.0
    %132 = vmatpush1.msra.mxu0 0.0
    %133 = vmatprep.subr.mxu0 0.0
    %134 = vmatpush1.msra.mxu0 0.0
    %135 = vmatprep.subr.mxu0 0.0
    %136 = vmatpush1.msra.mxu0 0.0
    %137 = vmatprep.subr.mxu0 0.0
    %138 = vmatpush1.msra.mxu0 0.0
    %139 = vmatprep.subr.mxu0 0.0
    %140 = vmatpush1.msra.mxu0 0.0
    %141 = vmatprep.subr.mxu0 0.0
    %142 = vmatpush1.msra.mxu0 0.0
    %143 = vmatprep.subr.mxu0 0.0
    %144 = vmatpush1.msra.mxu0 0.0
    %145 = vmatprep.subr.mxu0 0.0
    %146 = vmatpush1.msra.mxu0 0.0
    %147 = vmatprep.subr.mxu0 0.0
    %148 = vmatpush1.msra.mxu0 0.0
    %149 = vmatprep.subr.mxu0 0.0
    %150 = vmatpush1.msra.mxu0 0.0
    %151 = vmatprep.subr.mxu0 0.0
    %152 = vmatpush1.msra.mxu0 0.0
    %153 = vmatprep.subr.mxu0 0.0
    %154 = vmatpush1.msra.mxu0 0.0
    %155 = vmatprep.subr.mxu0 0.0
    %156 = vmatpush1.msra.mxu0 0.0
    %157 = vmatprep.subr.mxu0 0.0
    %158 = vmatpush1.msra.mxu0 0.0
    %159 = vmatprep.mubr.f32.mxu0 0.0
    %160 = vmatmul.mubr.f32.gmra.mrb[0].mxu0 %v90
    %v161 = vpop.f32.mrb[0].mxu0
    %v162 = vadd.f32 %v87, %v161
    %v163 = vpop.f32.mrb[0].mxu0
    %164 = vmatprep.mubr.f32.mxu0 0.0
    %165 = vmatmul.mubr.f32.gmra.mrb[0].mxu0 %v93
    %v166 = vpop.f32.mrb[0].mxu0
    %v167 = vadd.f32 %v87, %v166
    %v168 = vpop.f32.mrb[0].mxu0
    %169 = vdwg.mxu0
    %vm170 = vcmask 261120
    %v171 = vsel %vm170, %v162, 0.0
    %172 = vadd.xlane.f32.xlu0 %v171
    %v173 = vpop.xlane.xlu0 %172
    %v174 = vsel %vm170, %v167, 0.0
    %175 = vadd.xlane.f32.xlu0 %v174
    %v176 = vpop.xlane.xlu0 %175
    %v177 = vrcp.pop 32.0
    %v178 = vmul.f32 %v173, %v177
    %v179 = vmul.f32 %v176, %v177
    %v180 = vsub.f32 %v162, %v178
    %v181 = vsub.f32 %v167, %v179
    %v182 = vmul.f32 %v180, %v180
    %v183 = vmul.f32 %v181, %v181
    %v184 = vsel %vm170, %v182, 0.0
    %185 = vadd.xlane.f32.xlu0 %v184
    %v186 = vpop.xlane.xlu0 %185
    %v187 = vsel %vm170, %v183, 0.0
    %188 = vadd.xlane.f32.xlu0 %v187
    %v189 = vpop.xlane.xlu0 %188
    %v190 = vmul.f32 %v186, %v177
    %v191 = vmul.f32 %v189, %v177
    %v192 = vadd.f32 %v190, 1e-05
    %v193 = vadd.f32 %v191, 1e-05
    %v194 = vrsqrt.pop %v192
    %v195 = vrsqrt.pop %v193
    %v196 = vlaneseq
    %v197 = vshrl.u32 %v196, 7
    %v198 = vsub.s32 1, %v197
    %v199 = vrot.slane %v81, %v198
    %v200 = vmul.f32 %v199, %v194
    %v201 = vmul.f32 %v199, %v195
    %v202 = vmul.f32 %v180, %v200
    %v203 = vmul.f32 %v181, %v201
    %v204 = vlaneseq
    %v205 = vshrl.u32 %v204, 7
    %v206 = vsub.s32 2, %v205
    %v207 = vrot.slane %v81, %v206
    %v208 = vadd.f32 %v202, %v207
    %v209 = vadd.f32 %v203, %v207
    %v210 = vmul.f32 %v208, 0.5
    %v211 = vmul.f32 %v209, 0.5
    %v212 = vmul.f32 %v208, 0.70710677
    %v213 = vmul.f32 %v209, 0.70710677
    %v214 = verf.f32.pop %v212
    %v215 = verf.f32.pop %v213
    %v216 = vadd.f32 %v214, 1.0
    %v217 = vadd.f32 %v215, 1.0
    %v218 = vmul.f32 %v210, %v216
    %v219 = vmul.f32 %v211, %v217
    %v220 = vld [vmem:[#allocation8] sm:$0xff]
    %v221 = vld [vmem:[#allocation8 + $0x8] sm:$0xff]
    %v222 = vld [vmem:[#allocation8 + $0x10] sm:$0xff]
    %v223 = vld [vmem:[#allocation8 + $0x18] sm:$0xff]
    %v224 = vlaneseq
    %v225 = vshrl.u32 %v224, 7
    %v226 = vsub.s32 3, %v225
    %v227 = vrot.slane %v81, %v226
    %v229 = vsel %vm170, %v218, 0
    %v232 = vsel %vm170, %v219, 0
    %234 = vmatprep.subr.mxu0 0.0
    %235 = vmatpush1.msra.mxu0 %v220
    %236 = vmatprep.subr.mxu0 0.0
    %237 = vmatpush1.msra.mxu0 %v221
    %238 = vmatprep.subr.mxu0 0.0
    %239 = vmatpush1.msra.mxu0 %v222
    %240 = vmatprep.subr.mxu0 0.0
    %241 = vmatpush1.msra.mxu0 %v223
    %242 = vmatprep.subr.mxu0 0.0
    %243 = vmatpush1.msra.mxu0 0.0
    %244 = vmatprep.subr.mxu0 0.0
    %245 = vmatpush1.msra.mxu0 0.0
    %246 = vmatprep.subr.mxu0 0.0
    %247 = vmatpush1.msra.mxu0 0.0
    %248 = vmatprep.subr.mxu0 0.0
    %249 = vmatpush1.msra.mxu0 0.0
    %250 = vmatprep.subr.mxu0 0.0
    %251 = vmatpush1.msra.mxu0 0.0
    %252 = vmatprep.subr.mxu0 0.0
    %253 = vmatpush1.msra.mxu0 0.0
    %254 = vmatprep.subr.mxu0 0.0
    %255 = vmatpush1.msra.mxu0 0.0
    %256 = vmatprep.subr.mxu0 0.0
    %257 = vmatpush1.msra.mxu0 0.0
    %258 = vmatprep.subr.mxu0 0.0
    %259 = vmatpush1.msra.mxu0 0.0
    %260 = vmatprep.subr.mxu0 0.0
    %261 = vmatpush1.msra.mxu0 0.0
    %262 = vmatprep.subr.mxu0 0.0
    %263 = vmatpush1.msra.mxu0 0.0
    %264 = vmatprep.subr.mxu0 0.0
    %265 = vmatpush1.msra.mxu0 0.0
    %266 = vmatprep.subr.mxu0 0.0
    %267 = vmatpush1.msra.mxu0 0.0
    %268 = vmatprep.subr.mxu0 0.0
    %269 = vmatpush1.msra.mxu0 0.0
    %270 = vmatprep.subr.mxu0 0.0
    %271 = vmatpush1.msra.mxu0 0.0
    %272 = vmatprep.subr.mxu0 0.0
    %273 = vmatpush1.msra.mxu0 0.0
    %274 = vmatprep.subr.mxu0 0.0
    %275 = vmatpush1.msra.mxu0 0.0
    %276 = vmatprep.subr.mxu0 0.0
    %277 = vmatpush1.msra.mxu0 0.0
    %278 = vmatprep.subr.mxu0 0.0
    %279 = vmatpush1.msra.mxu0 0.0
    %280 = vmatprep.subr.mxu0 0.0
    %281 = vmatpush1.msra.mxu0 0.0
    %282 = vmatprep.subr.mxu0 0.0
    %283 = vmatpush1.msra.mxu0 0.0
    %284 = vmatprep.subr.mxu0 0.0
    %285 = vmatpush1.msra.mxu0 0.0
    %286 = vmatprep.subr.mxu0 0.0
    %287 = vmatpush1.msra.mxu0 0.0
    %288 = vmatprep.subr.mxu0 0.0
    %289 = vmatpush1.msra.mxu0 0.0
    %290 = vmatprep.subr.mxu0 0.0
    %291 = vmatpush1.msra.mxu0 0.0
    %292 = vmatprep.subr.mxu0 0.0
    %293 = vmatpush1.msra.mxu0 0.0
    %294 = vmatprep.subr.mxu0 0.0
    %295 = vmatpush1.msra.mxu0 0.0
    %296 = vmatprep.subr.mxu0 0.0
    %297 = vmatpush1.msra.mxu0 0.0
    %298 = vmatprep.mubr.f32.mxu0 0.0
    %299 = vmatmul.mubr.f32.gmra.mrb[0].mxu0 %v229
    %v300 = vpop.f32.mrb[0].mxu0
    %v301 = vadd.f32 %v227, %v300
    %v302 = vpop.f32.mrb[0].mxu0
    %303 = vmatprep.mubr.f32.mxu0 0.0
    %304 = vmatmul.mubr.f32.gmra.mrb[0].mxu0 %v232
    %v305 = vpop.f32.mrb[0].mxu0
    %v306 = vadd.f32 %v227, %v305
    %v307 = vpop.f32.mrb[0].mxu0
    %308 = vdwg.mxu0
    %s309 = scalar_lea.vmem %s4, 4
    %v310 = vld [vmem:[%s309] sm:$0xf]
    %v311 = vld [vmem:[#allocation7] sm:$0xff]
    %v312 = vld [vmem:[#allocation7 + $0x8] sm:$0xff]
    %v313 = vld [vmem:[#allocation7 + $0x10] sm:$0xff]
    %v314 = vld [vmem:[#allocation7 + $0x18] sm:$0xff]
    %v315 = vlaneseq
    %v316 = vshrl.u32 %v315, 7
    %v317 = vsub.s32 0, %v316
    %v318 = vrot.slane %v310, %v317
    %v320 = vsel %vm170, %v301, 0
    %v323 = vsel %vm170, %v306, 0
    %325 = vmatprep.subr.mxu0 0.0
    %326 = vmatpush1.msra.mxu0 %v311
    %327 = vmatprep.subr.mxu0 0.0
    %328 = vmatpush1.msra.mxu0 %v312
    %329 = vmatprep.subr.mxu0 0.0
    %330 = vmatpush1.msra.mxu0 %v313
    %331 = vmatprep.subr.mxu0 0.0
    %332 = vmatpush1.msra.mxu0 %v314
    %333 = vmatprep.subr.mxu0 0.0
    %334 = vmatpush1.msra.mxu0 0.0
    %335 = vmatprep.subr.mxu0 0.0
    %336 = vmatpush1.msra.mxu0 0.0
    %337 = vmatprep.subr.mxu0 0.0
    %338 = vmatpush1.msra.mxu0 0.0
    %339 = vmatprep.subr.mxu0 0.0
    %340 = vmatpush1.msra.mxu0 0.0
    %341 = vmatprep.subr.mxu0 0.0
    %342 = vmatpush1.msra.mxu0 0.0
    %343 = vmatprep.subr.mxu0 0.0
    %344 = vmatpush1.msra.mxu0 0.0
    %345 = vmatprep.subr.mxu0 0.0
    %346 = vmatpush1.msra.mxu0 0.0
    %347 = vmatprep.subr.mxu0 0.0
    %348 = vmatpush1.msra.mxu0 0.0
    %349 = vmatprep.subr.mxu0 0.0
    %350 = vmatpush1.msra.mxu0 0.0
    %351 = vmatprep.subr.mxu0 0.0
    %352 = vmatpush1.msra.mxu0 0.0
    %353 = vmatprep.subr.mxu0 0.0
    %354 = vmatpush1.msra.mxu0 0.0
    %355 = vmatprep.subr.mxu0 0.0
    %356 = vmatpush1.msra.mxu0 0.0
    %357 = vmatprep.subr.mxu0 0.0
    %358 = vmatpush1.msra.mxu0 0.0
    %359 = vmatprep.subr.mxu0 0.0
    %360 = vmatpush1.msra.mxu0 0.0
    %361 = vmatprep.subr.mxu0 0.0
    %362 = vmatpush1.msra.mxu0 0.0
    %363 = vmatprep.subr.mxu0 0.0
    %364 = vmatpush1.msra.mxu0 0.0
    %365 = vmatprep.subr.mxu0 0.0
    %366 = vmatpush1.msra.mxu0 0.0
    %367 = vmatprep.subr.mxu0 0.0
    %368 = vmatpush1.msra.mxu0 0.0
    %369 = vmatprep.subr.mxu0 0.0
    %370 = vmatpush1.msra.mxu0 0.0
    %371 = vmatprep.subr.mxu0 0.0
    %372 = vmatpush1.msra.mxu0 0.0
    %373 = vmatprep.subr.mxu0 0.0
    %374 = vmatpush1.msra.mxu0 0.0
    %375 = vmatprep.subr.mxu0 0.0
    %376 = vmatpush1.msra.mxu0 0.0
    %377 = vmatprep.subr.mxu0 0.0
    %378 = vmatpush1.msra.mxu0 0.0
    %379 = vmatprep.subr.mxu0 0.0
    %380 = vmatpush1.msra.mxu0 0.0
    %381 = vmatprep.subr.mxu0 0.0
    %382 = vmatpush1.msra.mxu0 0.0
    %383 = vmatprep.subr.mxu0 0.0
    %384 = vmatpush1.msra.mxu0 0.0
    %385 = vmatprep.subr.mxu0 0.0
    %386 = vmatpush1.msra.mxu0 0.0
    %387 = vmatprep.subr.mxu0 0.0
    %388 = vmatpush1.msra.mxu0 0.0
    %389 = vmatprep.mubr.f32.mxu0 0.0
    %390 = vmatmul.mubr.f32.gmra.mrb[0].mxu0 %v320
    %v391 = vpop.f32.mrb[0].mxu0
    %v392 = vadd.f32 %v318, %v391
    %v393 = vpop.f32.mrb[0].mxu0
    %394 = vmatprep.mubr.f32.mxu0 0.0
    %395 = vmatmul.mubr.f32.gmra.mrb[0].mxu0 %v323
    %v396 = vpop.f32.mrb[0].mxu0
    %v397 = vadd.f32 %v318, %v396
    %v398 = vpop.f32.mrb[0].mxu0
    %399 = vdwg.mxu0
    %v400 = vsel %vm170, %v392, 0.0
    %401 = vadd.xlane.f32.xlu0 %v400
    %v402 = vpop.xlane.xlu0 %401
    %v403 = vsel %vm170, %v397, 0.0
    %404 = vadd.xlane.f32.xlu0 %v403
    %v405 = vpop.xlane.xlu0 %404
    %v406 = vmul.f32 %v402, %v177
    %v407 = vmul.f32 %v405, %v177
    %v408 = vsub.f32 %v392, %v406
    %v409 = vsub.f32 %v397, %v407
    %v410 = vmul.f32 %v408, %v408
    %v411 = vmul.f32 %v409, %v409
    %v412 = vsel %vm170, %v410, 0.0
    %413 = vadd.xlane.f32.xlu0 %v412
    %v414 = vpop.xlane.xlu0 %413
    %v415 = vsel %vm170, %v411, 0.0
    %416 = vadd.xlane.f32.xlu0 %v415
    %v417 = vpop.xlane.xlu0 %416
    %v418 = vmul.f32 %v414, %v177
    %v419 = vmul.f32 %v417, %v177
    %v420 = vadd.f32 %v418, 1e-05
    %v421 = vadd.f32 %v419, 1e-05
    %v422 = vrsqrt.pop %v420
    %v423 = vrsqrt.pop %v421
    %v424 = vlaneseq
    %v425 = vshrl.u32 %v424, 7
    %v426 = vsub.s32 1, %v425
    %v427 = vrot.slane %v310, %v426
    %v428 = vmul.f32 %v427, %v422
    %v429 = vmul.f32 %v427, %v423
    %v430 = vmul.f32 %v408, %v428
    %v431 = vmul.f32 %v409, %v429
    %v432 = vlaneseq
    %v433 = vshrl.u32 %v432, 7
    %v434 = vsub.s32 2, %v433
    %v435 = vrot.slane %v310, %v434
    %v436 = vadd.f32 %v430, %v435
    %v437 = vadd.f32 %v431, %v435
    %v438 = vmul.f32 %v436, 0.5
    %v439 = vmul.f32 %v437, 0.5
    %v440 = vmul.f32 %v436, 0.70710677
    %v441 = vmul.f32 %v437, 0.70710677
    %v442 = verf.f32.pop %v440
    %v443 = verf.f32.pop %v441
    %v444 = vadd.f32 %v442, 1.0
    %v445 = vadd.f32 %v443, 1.0
    %v446 = vmul.f32 %v438, %v444
    %v447 = vmul.f32 %v439, %v445
    %s448 = scalar_lea.vmem [#allocation8], 32
    %v449 = vld [vmem:[%s448] sm:$0xff]
    %v450 = vld [vmem:[%s448 + $0x8] sm:$0xff]
    %v451 = vld [vmem:[%s448 + $0x10] sm:$0xff]
    %v452 = vld [vmem:[%s448 + $0x18] sm:$0xff]
    %v453 = vlaneseq
    %v454 = vshrl.u32 %v453, 7
    %v455 = vsub.s32 3, %v454
    %v456 = vrot.slane %v310, %v455
    %v458 = vsel %vm170, %v446, 0
    %v461 = vsel %vm170, %v447, 0
    %463 = vmatprep.subr.mxu0 0.0
    %464 = vmatpush1.msra.mxu0 %v449
    %465 = vmatprep.subr.mxu0 0.0
    %466 = vmatpush1.msra.mxu0 %v450
    %467 = vmatprep.subr.mxu0 0.0
    %468 = vmatpush1.msra.mxu0 %v451
    %469 = vmatprep.subr.mxu0 0.0
    %470 = vmatpush1.msra.mxu0 %v452
    %471 = vmatprep.subr.mxu0 0.0
    %472 = vmatpush1.msra.mxu0 0.0
    %473 = vmatprep.subr.mxu0 0.0
    %474 = vmatpush1.msra.mxu0 0.0
    %475 = vmatprep.subr.mxu0 0.0
    %476 = vmatpush1.msra.mxu0 0.0
    %477 = vmatprep.subr.mxu0 0.0
    %478 = vmatpush1.msra.mxu0 0.0
    %479 = vmatprep.subr.mxu0 0.0
    %480 = vmatpush1.msra.mxu0 0.0
    %481 = vmatprep.subr.mxu0 0.0
    %482 = vmatpush1.msra.mxu0 0.0
    %483 = vmatprep.subr.mxu0 0.0
    %484 = vmatpush1.msra.mxu0 0.0
    %485 = vmatprep.subr.mxu0 0.0
    %486 = vmatpush1.msra.mxu0 0.0
    %487 = vmatprep.subr.mxu0 0.0
    %488 = vmatpush1.msra.mxu0 0.0
    %489 = vmatprep.subr.mxu0 0.0
    %490 = vmatpush1.msra.mxu0 0.0
    %491 = vmatprep.subr.mxu0 0.0
    %492 = vmatpush1.msra.mxu0 0.0
    %493 = vmatprep.subr.mxu0 0.0
    %494 = vmatpush1.msra.mxu0 0.0
    %495 = vmatprep.subr.mxu0 0.0
    %496 = vmatpush1.msra.mxu0 0.0
    %497 = vmatprep.subr.mxu0 0.0
    %498 = vmatpush1.msra.mxu0 0.0
    %499 = vmatprep.subr.mxu0 0.0
    %500 = vmatpush1.msra.mxu0 0.0
    %501 = vmatprep.subr.mxu0 0.0
    %502 = vmatpush1.msra.mxu0 0.0
    %503 = vmatprep.subr.mxu0 0.0
    %504 = vmatpush1.msra.mxu0 0.0
    %505 = vmatprep.subr.mxu0 0.0
    %506 = vmatpush1.msra.mxu0 0.0
    %507 = vmatprep.subr.mxu0 0.0
    %508 = vmatpush1.msra.mxu0 0.0
    %509 = vmatprep.subr.mxu0 0.0
    %510 = vmatpush1.msra.mxu0 0.0
    %511 = vmatprep.subr.mxu0 0.0
    %512 = vmatpush1.msra.mxu0 0.0
    %513 = vmatprep.subr.mxu0 0.0
    %514 = vmatpush1.msra.mxu0 0.0
    %515 = vmatprep.subr.mxu0 0.0
    %516 = vmatpush1.msra.mxu0 0.0
    %517 = vmatprep.subr.mxu0 0.0
    %518 = vmatpush1.msra.mxu0 0.0
    %519 = vmatprep.subr.mxu0 0.0
    %520 = vmatpush1.msra.mxu0 0.0
    %521 = vmatprep.subr.mxu0 0.0
    %522 = vmatpush1.msra.mxu0 0.0
    %523 = vmatprep.subr.mxu0 0.0
    %524 = vmatpush1.msra.mxu0 0.0
    %525 = vmatprep.subr.mxu0 0.0
    %526 = vmatpush1.msra.mxu0 0.0
    %527 = vmatprep.mubr.f32.mxu0 0.0
    %528 = vmatmul.mubr.f32.gmra.mrb[0].mxu0 %v458
    %v529 = vpop.f32.mrb[0].mxu0
    %v530 = vadd.f32 %v456, %v529
    %v531 = vpop.f32.mrb[0].mxu0
    %532 = vmatprep.mubr.f32.mxu0 0.0
    %533 = vmatmul.mubr.f32.gmra.mrb[0].mxu0 %v461
    %v534 = vpop.f32.mrb[0].mxu0
    %v535 = vadd.f32 %v456, %v534
    %v536 = vpop.f32.mrb[0].mxu0
    %537 = vdwg.mxu0
    %s538 = scalar_lea.vmem %s4, 8
    %v539 = vld [vmem:[%s538] sm:$0xf]
    %s540 = scalar_lea.vmem [#allocation7], 32
    %v541 = vld [vmem:[%s540] sm:$0xff]
    %v542 = vld [vmem:[%s540 + $0x8] sm:$0xff]
    %v543 = vld [vmem:[%s540 + $0x10] sm:$0xff]
    %v544 = vld [vmem:[%s540 + $0x18] sm:$0xff]
    %v545 = vlaneseq
    %v546 = vshrl.u32 %v545, 7
    %v547 = vsub.s32 0, %v546
    %v548 = vrot.slane %v539, %v547
    %v550 = vsel %vm170, %v530, 0
    %v553 = vsel %vm170, %v535, 0
    %555 = vmatprep.subr.mxu0 0.0
    %556 = vmatpush1.msra.mxu0 %v541
    %557 = vmatprep.subr.mxu0 0.0
    %558 = vmatpush1.msra.mxu0 %v542
    %559 = vmatprep.subr.mxu0 0.0
    %560 = vmatpush1.msra.mxu0 %v543
    %561 = vmatprep.subr.mxu0 0.0
    %562 = vmatpush1.msra.mxu0 %v544
    %563 = vmatprep.subr.mxu0 0.0
    %564 = vmatpush1.msra.mxu0 0.0
    %565 = vmatprep.subr.mxu0 0.0
    %566 = vmatpush1.msra.mxu0 0.0
    %567 = vmatprep.subr.mxu0 0.0
    %568 = vmatpush1.msra.mxu0 0.0
    %569 = vmatprep.subr.mxu0 0.0
    %570 = vmatpush1.msra.mxu0 0.0
    %571 = vmatprep.subr.mxu0 0.0
    %572 = vmatpush1.msra.mxu0 0.0
    %573 = vmatprep.subr.mxu0 0.0
    %574 = vmatpush1.msra.mxu0 0.0
    %575 = vmatprep.subr.mxu0 0.0
    %576 = vmatpush1.msra.mxu0 0.0
    %577 = vmatprep.subr.mxu0 0.0
    %578 = vmatpush1.msra.mxu0 0.0
    %579 = vmatprep.subr.mxu0 0.0
    %580 = vmatpush1.msra.mxu0 0.0
    %581 = vmatprep.subr.mxu0 0.0
    %582 = vmatpush1.msra.mxu0 0.0
    %583 = vmatprep.subr.mxu0 0.0
    %584 = vmatpush1.msra.mxu0 0.0
    %585 = vmatprep.subr.mxu0 0.0
    %586 = vmatpush1.msra.mxu0 0.0
    %587 = vmatprep.subr.mxu0 0.0
    %588 = vmatpush1.msra.mxu0 0.0
    %589 = vmatprep.subr.mxu0 0.0
    %590 = vmatpush1.msra.mxu0 0.0
    %591 = vmatprep.subr.mxu0 0.0
    %592 = vmatpush1.msra.mxu0 0.0
    %593 = vmatprep.subr.mxu0 0.0
    %594 = vmatpush1.msra.mxu0 0.0
    %595 = vmatprep.subr.mxu0 0.0
    %596 = vmatpush1.msra.mxu0 0.0
    %597 = vmatprep.subr.mxu0 0.0
    %598 = vmatpush1.msra.mxu0 0.0
    %599 = vmatprep.subr.mxu0 0.0
    %600 = vmatpush1.msra.mxu0 0.0
    %601 = vmatprep.subr.mxu0 0.0
    %602 = vmatpush1.msra.mxu0 0.0
    %603 = vmatprep.subr.mxu0 0.0
    %604 = vmatpush1.msra.mxu0 0.0
    %605 = vmatprep.subr.mxu0 0.0
    %606 = vmatpush1.msra.mxu0 0.0
    %607 = vmatprep.subr.mxu0 0.0
    %608 = vmatpush1.msra.mxu0 0.0
    %609 = vmatprep.subr.mxu0 0.0
    %610 = vmatpush1.msra.mxu0 0.0
    %611 = vmatprep.subr.mxu0 0.0
    %612 = vmatpush1.msra.mxu0 0.0
    %613 = vmatprep.subr.mxu0 0.0
    %614 = vmatpush1.msra.mxu0 0.0
    %615 = vmatprep.subr.mxu0 0.0
    %616 = vmatpush1.msra.mxu0 0.0
    %617 = vmatprep.subr.mxu0 0.0
    %618 = vmatpush1.msra.mxu0 0.0
    %619 = vmatprep.mubr.f32.mxu0 0.0
    %620 = vmatmul.mubr.f32.gmra.mrb[0].mxu0 %v550
    %v621 = vpop.f32.mrb[0].mxu0
    %v622 = vadd.f32 %v548, %v621
    %v623 = vpop.f32.mrb[0].mxu0
    %624 = vmatprep.mubr.f32.mxu0 0.0
    %625 = vmatmul.mubr.f32.gmra.mrb[0].mxu0 %v553
    %v626 = vpop.f32.mrb[0].mxu0
    %v627 = vadd.f32 %v548, %v626
    %v628 = vpop.f32.mrb[0].mxu0
    %629 = vdwg.mxu0
    %v630 = vsel %vm170, %v622, 0.0
    %631 = vadd.xlane.f32.xlu0 %v630
    %v632 = vpop.xlane.xlu0 %631
    %v633 = vsel %vm170, %v627, 0.0
    %634 = vadd.xlane.f32.xlu0 %v633
    %v635 = vpop.xlane.xlu0 %634
    %v636 = vmul.f32 %v632, %v177
    %v637 = vmul.f32 %v635, %v177
    %v638 = vsub.f32 %v622, %v636
    %v639 = vsub.f32 %v627, %v637
    %v640 = vmul.f32 %v638, %v638
    %v641 = vmul.f32 %v639, %v639
    %v642 = vsel %vm170, %v640, 0.0
    %643 = vadd.xlane.f32.xlu0 %v642
    %v644 = vpop.xlane.xlu0 %643
    %v645 = vsel %vm170, %v641, 0.0
    %646 = vadd.xlane.f32.xlu0 %v645
    %v647 = vpop.xlane.xlu0 %646
    %v648 = vmul.f32 %v644, %v177
    %v649 = vmul.f32 %v647, %v177
    %v650 = vadd.f32 %v648, 1e-05
    %v651 = vadd.f32 %v649, 1e-05
    %v652 = vrsqrt.pop %v650
    %v653 = vrsqrt.pop %v651
    %v654 = vlaneseq
    %v655 = vshrl.u32 %v654, 7
    %v656 = vsub.s32 1, %v655
    %v657 = vrot.slane %v539, %v656
    %v658 = vmul.f32 %v657, %v652
    %v659 = vmul.f32 %v657, %v653
    %v660 = vmul.f32 %v638, %v658
    %v661 = vmul.f32 %v639, %v659
    %v662 = vlaneseq
    %v663 = vshrl.u32 %v662, 7
    %v664 = vsub.s32 2, %v663
    %v665 = vrot.slane %v539, %v664
    %v666 = vadd.f32 %v660, %v665
    %v667 = vadd.f32 %v661, %v665
    %v668 = vmul.f32 %v666, 0.5
    %v669 = vmul.f32 %v667, 0.5
    %v670 = vmul.f32 %v666, 0.70710677
    %v671 = vmul.f32 %v667, 0.70710677
    %v672 = verf.f32.pop %v670
    %v673 = verf.f32.pop %v671
    %v674 = vadd.f32 %v672, 1.0
    %v675 = vadd.f32 %v673, 1.0
    %v676 = vmul.f32 %v668, %v674
    %v677 = vmul.f32 %v669, %v675
    %s678 = scalar_lea.vmem [#allocation8], 64
    %v679 = vld [vmem:[%s678] sm:$0xff]
    %v680 = vld [vmem:[%s678 + $0x8] sm:$0xff]
    %v681 = vld [vmem:[%s678 + $0x10] sm:$0xff]
    %v682 = vld [vmem:[%s678 + $0x18] sm:$0xff]
    %v683 = vlaneseq
    %v684 = vshrl.u32 %v683, 7
    %v685 = vsub.s32 3, %v684
    %v686 = vrot.slane %v539, %v685
    %v688 = vsel %vm170, %v676, 0
    %v691 = vsel %vm170, %v677, 0
    %693 = vmatprep.subr.mxu0 0.0
    %694 = vmatpush1.msra.mxu0 %v679
    %695 = vmatprep.subr.mxu0 0.0
    %696 = vmatpush1.msra.mxu0 %v680
    %697 = vmatprep.subr.mxu0 0.0
    %698 = vmatpush1.msra.mxu0 %v681
    %699 = vmatprep.subr.mxu0 0.0
    %700 = vmatpush1.msra.mxu0 %v682
    %701 = vmatprep.subr.mxu0 0.0
    %702 = vmatpush1.msra.mxu0 0.0
    %703 = vmatprep.subr.mxu0 0.0
    %704 = vmatpush1.msra.mxu0 0.0
    %705 = vmatprep.subr.mxu0 0.0
    %706 = vmatpush1.msra.mxu0 0.0
    %707 = vmatprep.subr.mxu0 0.0
    %708 = vmatpush1.msra.mxu0 0.0
    %709 = vmatprep.subr.mxu0 0.0
    %710 = vmatpush1.msra.mxu0 0.0
    %711 = vmatprep.subr.mxu0 0.0
    %712 = vmatpush1.msra.mxu0 0.0
    %713 = vmatprep.subr.mxu0 0.0
    %714 = vmatpush1.msra.mxu0 0.0
    %715 = vmatprep.subr.mxu0 0.0
    %716 = vmatpush1.msra.mxu0 0.0
    %717 = vmatprep.subr.mxu0 0.0
    %718 = vmatpush1.msra.mxu0 0.0
    %719 = vmatprep.subr.mxu0 0.0
    %720 = vmatpush1.msra.mxu0 0.0
    %721 = vmatprep.subr.mxu0 0.0
    %722 = vmatpush1.msra.mxu0 0.0
    %723 = vmatprep.subr.mxu0 0.0
    %724 = vmatpush1.msra.mxu0 0.0
    %725 = vmatprep.subr.mxu0 0.0
    %726 = vmatpush1.msra.mxu0 0.0
    %727 = vmatprep.subr.mxu0 0.0
    %728 = vmatpush1.msra.mxu0 0.0
    %729 = vmatprep.subr.mxu0 0.0
    %730 = vmatpush1.msra.mxu0 0.0
    %731 = vmatprep.subr.mxu0 0.0
    %732 = vmatpush1.msra.mxu0 0.0
    %733 = vmatprep.subr.mxu0 0.0
    %734 = vmatpush1.msra.mxu0 0.0
    %735 = vmatprep.subr.mxu0 0.0
    %736 = vmatpush1.msra.mxu0 0.0
    %737 = vmatprep.subr.mxu0 0.0
    %738 = vmatpush1.msra.mxu0 0.0
    %739 = vmatprep.subr.mxu0 0.0
    %740 = vmatpush1.msra.mxu0 0.0
    %741 = vmatprep.subr.mxu0 0.0
    %742 = vmatpush1.msra.mxu0 0.0
    %743 = vmatprep.subr.mxu0 0.0
    %744 = vmatpush1.msra.mxu0 0.0
    %745 = vmatprep.subr.mxu0 0.0
    %746 = vmatpush1.msra.mxu0 0.0
    %747 = vmatprep.subr.mxu0 0.0
    %748 = vmatpush1.msra.mxu0 0.0
    %749 = vmatprep.subr.mxu0 0.0
    %750 = vmatpush1.msra.mxu0 0.0
    %751 = vmatprep.subr.mxu0 0.0
    %752 = vmatpush1.msra.mxu0 0.0
    %753 = vmatprep.subr.mxu0 0.0
    %754 = vmatpush1.msra.mxu0 0.0
    %755 = vmatprep.subr.mxu0 0.0
    %756 = vmatpush1.msra.mxu0 0.0
    %757 = vmatprep.mubr.f32.mxu0 0.0
    %758 = vmatmul.mubr.f32.gmra.mrb[0].mxu0 %v688
    %v759 = vpop.f32.mrb[0].mxu0
    %v760 = vadd.f32 %v686, %v759
    %v761 = vpop.f32.mrb[0].mxu0
    %762 = vmatprep.mubr.f32.mxu0 0.0
    %763 = vmatmul.mubr.f32.gmra.mrb[0].mxu0 %v691
    %v764 = vpop.f32.mrb[0].mxu0
    %v765 = vadd.f32 %v686, %v764
    %v766 = vpop.f32.mrb[0].mxu0
    %767 = vdwg.mxu0
    %768 = vrot.lane.b32.xlu0 %v530, 32
    %v769 = vpop.permute.xlu0 %768
    %770 = vrot.lane.b32.xlu0 %v535, 32
    %v771 = vpop.permute.xlu0 %770
    %776 = vrot.lane.b32.xlu0 %v760, 64
    %v777 = vpop.permute.xlu0 %776
    %778 = vrot.lane.b32.xlu0 %v765, 64
    %v779 = vpop.permute.xlu0 %778
    %v782 = vsel %vm170, %v301, %v769
    %v783 = vsel %vm170, %v306, %v771
    %vm784 = vcmask 523264
    %v785 = vsel %vm784, %v782, %v777
    %v786 = vsel %vm784, %v783, %v779
    %vm787 = vcmask 785408
    %788 = vst.msk [vmem:[#allocation10] sm:$0xff] %vm787, %v785
    %789 = vst.msk [vmem:[#allocation10 + $0x8] sm:$0xff] %vm787, %v786
    %v790 = vadd.f32 %v301, 0.0
    %v791 = vadd.f32 %v306, 0.0
    %v792 = vadd.f32 %v790, %v530
    %v793 = vadd.f32 %v791, %v535
    %v794 = vadd.f32 %v792, %v760
    %v795 = vadd.f32 %v793, %v765
    %v796 = vmul.f32 %v794, 0.33333334
    %v797 = vmul.f32 %v795, 0.33333334
    %798 = vst.msk [vmem:[#allocation11] sm:$0xff] %vm170, %v796
    %799 = vst.msk [vmem:[#allocation11 + $0x8] sm:$0xff] %vm170, %v797
    // Predicated region
    $region38: #{tpu_custom_call.1} parent=1 // pred_check
      _
    $region39: #{tpu_custom_call.1} parent=1 // pred_check_branch
      %801 = sbr.rel (0) target = $region41
    $region40: #{tpu_custom_call.1} parent=1 // pred_region
      %s803 = ssub.s32 256, 256
      %804 = vsyncadd [#allocation4], %s803
      %s805 = sshll.u32 [#allocation10], 4
      %s806 = int_to_ptr.vmem [resolvable:$true] %s805
      %811 = dma.vmem_to_hbm [thread:$0]  %s806, 256, %s5, [#allocation4], 128, 128, 8
    $region41: #{tpu_custom_call.1} parent=1 // pred_fallthru
      _
    // Predicated region
    $region42: #{tpu_custom_call.1} parent=1 // pred_check
      _
    $region43: #{tpu_custom_call.1} parent=1 // pred_check_branch
      %813 = sbr.rel (0) target = $region45
    $region44: #{tpu_custom_call.1} parent=1 // pred_region
      %s815 = ssub.s32 256, 256
      %816 = vsyncadd [#allocation12], %s815
      %s817 = sshll.u32 [#allocation11], 4
      %s818 = int_to_ptr.vmem [resolvable:$true] %s817
      %823 = dma.vmem_to_hbm [thread:$0]  %s818, 256, %s6, [#allocation12], 128, 128, 8
    $region45: #{tpu_custom_call.1} parent=1 // pred_fallthru
      _
    // Predicated region
    $region46: #{tpu_custom_call.1} parent=1 // pred_check
      _
    $region47: #{tpu_custom_call.1} parent=1 // pred_check_branch
      %825 = sbr.rel (0) target = $region49
    $region48: #{tpu_custom_call.1} parent=1 // pred_region
      %826 = dma.done [#allocation4], 256
    $region49: #{tpu_custom_call.1} parent=1 // pred_fallthru
      _
    // Predicated region
    $region50: #{tpu_custom_call.1} parent=1 // pred_check
      _
    $region51: #{tpu_custom_call.1} parent=1 // pred_check_branch
      %828 = sbr.rel (0) target = $region53
    $region52: #{tpu_custom_call.1} parent=1 // pred_region
      %829 = dma.done [#allocation12], 256
    $region53: #{tpu_custom_call.1} parent=1 // pred_fallthru
      _
    %830 = vsyncpa [#allocation3], 1
    %831 = vsyncpa [#allocation6], 1
    %832 = vsyncpa [#allocation9], 1
    %833 = vsyncpa [#allocation4], 1
    %834 = vsyncpa [#allocation12], 1

</llo_original>
